<compile_context>
chip_gen: v6e
topology: v6e:2x2x1
jax: 0.10.0
libtpu: 0.0.40
codegen_flags: <defaults>
</compile_context>

<pallas_src>
import functools

import jax
import jax.numpy as jnp
from jax.experimental import pallas as pl
from jax.experimental.pallas import tpu as pltpu

LANES = 128
MAX_BLK_ROWS = 2048   # (2048,128) f32 = 1 MiB/block; 2 inputs x 2 buffers = 4 MiB VMEM


def _num_tensorcores():
    """TensorCores the leading 'parallel' grid axis can shard across."""
    try:
        info = pltpu.get_tpu_info()
        for attr in ("num_cores", "num_tensorcores", "tensor_core_count", "core_count"):
            v = getattr(info, attr, None)
            if v is not None and 1 <= int(v) <= 8:
                return int(v)
    except Exception:
        pass
    return 2   # safe default: near-free on single-TC chips, needed on megacore/v7x


def _dice_bce_kernel(x_ref, t_ref, inter_ref, sxt_ref, bce_ref,
                     *, br, spc, rows, needs_mask):
    c = pl.program_id(0)   # core-split axis ("parallel")
    i = pl.program_id(1)   # reduction axis ("arbitrary")

    @pl.when(i == 0)
    def _():
        inter_ref[...] = jnp.zeros_like(inter_ref)
        sxt_ref[...] = jnp.zeros_like(sxt_ref)
        bce_ref[...] = jnp.zeros_like(bce_ref)

    def fold(v):
        # (br, 128) -> (8, 128): tile-aligned partial sums, pure VPU vreg adds.
        return v.reshape(br // 8, 8, LANES).sum(axis=0)

    def load(ref):
        return ref[...].astype(jnp.float32)   # bf16 streams upcast after the load

    def accumulate(x, t):
        # BCE per element (PyTorch clamps each log term at -100, which also
        # makes zeroed (x = t = 0) padding lanes contribute exactly 0).
        log_p = jnp.maximum(jnp.log(x), -100.0)
        log_1mp = jnp.maximum(jnp.log(1.0 - x), -100.0)
        bce_pos = log_1mp + t * (log_p - log_1mp)   # == -(elementwise BCE)
        inter_ref[0] += fold(x * t)
        sxt_ref[0] += fold(x + t)
        bce_ref[0] += fold(bce_pos)

    if needs_mask:
        row0 = (c * spc + i) * br          # logical (unclamped) first row
        full = row0 + br <= rows

        @pl.when(full)                      # fast path: unmasked full block
        def _():
            accumulate(load(x_ref), load(t_ref))

        @pl.when(jnp.logical_not(full) & (row0 < rows))   # ragged tail block only
        def _():
            rid = jax.lax.broadcasted_iota(jnp.int32, (br, LANES), 0)
            valid = (rid + row0) < rows
            accumulate(jnp.where(valid, load(x_ref), 0.0),
                       jnp.where(valid, load(t_ref), 0.0))
        # Fully out-of-range clamped steps fall through: no compute at all.
    else:
        accumulate(load(x_ref), load(t_ref))


def dice_bce_loss(inputs, targets, smooth=1.0):
    """Equivalent of DiceBCELoss.forward(inputs, targets, smooth=1)."""
    x = jnp.reshape(inputs, (-1,))
    t = jnp.reshape(targets, (-1,))
    n = x.shape[0]

    # Stream bf16 natively (half the HBM bytes on the mem-bound generations);
    # everything else is streamed as f32.  Accumulation is always f32.
    work_dtype = jnp.bfloat16 if x.dtype == jnp.bfloat16 else jnp.float32
    x = x.astype(work_dtype)
    t = t.astype(work_dtype)

    row_mult = 16 if work_dtype == jnp.bfloat16 else 8   # sublane tile (bf16 packs 2/row)
    chunk = row_mult * LANES
    n_main = (n // chunk) * chunk                         # kernel-aligned prefix

    inter = jnp.float32(0.0)
    sum_xt = jnp.float32(0.0)
    bce_pos = jnp.float32(0.0)

    if n_main > 0:
        rows = n_main // LANES                            # multiple of row_mult
        x2 = x[:n_main].reshape(rows, LANES)              # zero-copy view of the prefix
        t2 = t[:n_main].reshape(rows, LANES)

        br = min(MAX_BLK_ROWS, rows)                      # block rows (tile-aligned)
        nblocks = pl.cdiv(rows, br)
        ncores = max(1, min(_num_tensorcores(), nblocks))
        spc = pl.cdiv(nblocks, ncores)                    # grid steps per core
        needs_mask = (rows % br != 0) or (spc * ncores != nblocks)

        def in_map(c, i):
            # Clamp so out-of-range steps re-read a valid block; the kernel
            # skips / masks them using the logical (unclamped) row offset.
            return (jnp.minimum(c * spc + i, nblocks - 1), 0)

        out_map = lambda c, i: (c, 0, 0)
        part_shape = jax.ShapeDtypeStruct((ncores, 8, LANES), jnp.float32)
        part_spec = pl.BlockSpec((1, 8, LANES), out_map)

        kernel = functools.partial(_dice_bce_kernel, br=br, spc=spc, rows=rows,
                                   needs_mask=needs_mask)

        inter_p, sxt_p, bce_p = pl.pallas_call(
            kernel,
            out_shape=(part_shape, part_shape, part_shape),
            grid=(ncores, spc),
            in_specs=[pl.BlockSpec((br, LANES), in_map),
                      pl.BlockSpec((br, LANES), in_map)],
            out_specs=(part_spec, part_spec, part_spec),
            compiler_params=pltpu.CompilerParams(
                dimension_semantics=("parallel", "arbitrary")),
        )(x2, t2)

        # Tiny final cross-lane reduction on a few KiB of partials.
        inter = inter + jnp.sum(inter_p)
        sum_xt = sum_xt + jnp.sum(sxt_p)
        bce_pos = bce_pos + jnp.sum(bce_p)

    if n_main < n:
        # Ragged remainder (< chunk elements): tiny jnp reduction, avoids any
        # whole-array pad / extra HBM traffic.
        xt = x[n_main:].astype(jnp.float32)
        tt = t[n_main:].astype(jnp.float32)
        log_p = jnp.maximum(jnp.log(xt), -100.0)
        log_1mp = jnp.maximum(jnp.log(1.0 - xt), -100.0)
        inter = inter + jnp.sum(xt * tt)
        sum_xt = sum_xt + jnp.sum(xt + tt)
        bce_pos = bce_pos + jnp.sum(log_1mp + tt * (log_p - log_1mp))

    bce_mean = -bce_pos / n
    dice_loss = 1.0 - (2.0 * inter + smooth) / (sum_xt + smooth)
    return bce_mean + dice_loss


def _reference(inputs, targets, smooth=1.0):
    x = inputs.reshape(-1).astype(jnp.float32)
    t = targets.reshape(-1).astype(jnp.float32)
    inter = jnp.sum(x * t)
    dice = 1.0 - (2.0 * inter + smooth) / (jnp.sum(x) + jnp.sum(t) + smooth)
    bce = jnp.mean(-(t * jnp.maximum(jnp.log(x), -100.0)
                     + (1.0 - t) * jnp.maximum(jnp.log(1.0 - x), -100.0)))
    return bce + dice


if __name__ == "__main__":
    key = jax.random.PRNGKey(0)
    k1, k2 = jax.random.split(key)
    shape = (2, 4, 16, 16)  # NCHW, like the PyTorch use-case (segmentation probs)
    inputs = jax.nn.sigmoid(jax.random.normal(k1, shape, dtype=jnp.float32))
    targets = (jax.random.uniform(k2, shape) > 0.5).astype(jnp.float32)

    # f32 path
    loss = jax.block_until_ready(dice_bce_loss(inputs, targets))
    ref = jax.block_until_ready(_reference(inputs, targets))
    assert jnp.isfinite(loss), "loss is not finite"
    assert jnp.allclose(loss, ref, rtol=1e-5, atol=1e-5), (loss, ref)

    # bf16 streaming path (native bf16 blocks, f32 accumulation)
    loss_bf = jax.block_until_ready(
        dice_bce_loss(inputs.astype(jnp.bfloat16), targets.astype(jnp.bfloat16)))
    ref_bf = jax.block_until_ready(
        _reference(inputs.astype(jnp.bfloat16), targets.astype(jnp.bfloat16)))
    assert jnp.isfinite(loss_bf), "bf16 loss is not finite"
    assert jnp.allclose(loss_bf, ref_bf, rtol=1e-3, atol=1e-3), (loss_bf, ref_bf)

    # Ragged length: kernel handles the aligned prefix, jnp handles the tail.
    flat_n = 3 * 1024 + 77
    xr = jax.nn.sigmoid(jax.random.normal(k1, (flat_n,), dtype=jnp.float32))
    tr = (jax.random.uniform(k2, (flat_n,)) > 0.5).astype(jnp.float32)
    loss_r = jax.block_until_ready(dice_bce_loss(xr, tr))
    ref_r = jax.block_until_ready(_reference(xr, tr))
    assert jnp.allclose(loss_r, ref_r, rtol=1e-5, atol=1e-5), (loss_r, ref_r)

    print("KERNEL_OK")
</pallas_src>

<mosaic_0001>
module attributes {stable_mosaic.version = 11 : i64} {
  func.func @_dice_bce_kernel(%arg0: i32, %arg1: i32, %arg2: memref<16x128xf32, #tpu.memory_space<vmem>>, %arg3: memref<16x128xf32, #tpu.memory_space<vmem>>, %arg4: memref<1x8x128xf32, #tpu.memory_space<vmem>>, %arg5: memref<1x8x128xf32, #tpu.memory_space<vmem>>, %arg6: memref<1x8x128xf32, #tpu.memory_space<vmem>>) attributes {dimension_semantics = [#tpu.dimension_semantics<parallel>, #tpu.dimension_semantics<arbitrary>], iteration_bounds = array<i64: 1, 1>, scalar_prefetch = 0 : i64, scratch_operands = 0 : i64, tpu.core_type = #tpu.core_type<tc>, window_params = [{transform_indices = @transform_0, window_bounds = array<i64: 16, 128>}, {transform_indices = @transform_1, window_bounds = array<i64: 16, 128>}, {transform_indices = @transform_2, window_bounds = array<i64: 1, 8, 128>}, {transform_indices = @transform_3, window_bounds = array<i64: 1, 8, 128>}, {transform_indices = @transform_4, window_bounds = array<i64: 1, 8, 128>}]} {
    %c0_i32 = arith.constant 0 : i32
    %0 = arith.cmpi eq, %arg1, %c0_i32 : i32
    %1 = arith.extui %0 : i1 to i32
    %c0_i32_0 = arith.constant 0 : i32
    %2 = arith.cmpi ne, %1, %c0_i32_0 : i32
    scf.if %2 {
      %cst_27 = arith.constant 0.000000e+00 : f32
      %42 = vector.broadcast %cst_27 : f32 to vector<1x8x128xf32>
      %c0_28 = arith.constant 0 : index
      %c0_29 = arith.constant 0 : index
      %c0_30 = arith.constant 0 : index
      %43 = vector.load %arg4[%c0_28, %c0_29, %c0_30] : memref<1x8x128xf32, #tpu.memory_space<vmem>>, vector<1x8x128xf32>
      tpu.vector_store %arg4[%c0_28, %c0_29, %c0_30], %42 {strides = array<i32>} : memref<1x8x128xf32, #tpu.memory_space<vmem>>, vector<1x8x128xf32>,
      %cst_31 = arith.constant 0.000000e+00 : f32
      %44 = vector.broadcast %cst_31 : f32 to vector<1x8x128xf32>
      %c0_32 = arith.constant 0 : index
      %c0_33 = arith.constant 0 : index
      %c0_34 = arith.constant 0 : index
      %45 = vector.load %arg5[%c0_32, %c0_33, %c0_34] : memref<1x8x128xf32, #tpu.memory_space<vmem>>, vector<1x8x128xf32>
      tpu.vector_store %arg5[%c0_32, %c0_33, %c0_34], %44 {strides = array<i32>} : memref<1x8x128xf32, #tpu.memory_space<vmem>>, vector<1x8x128xf32>,
      %cst_35 = arith.constant 0.000000e+00 : f32
      %46 = vector.broadcast %cst_35 : f32 to vector<1x8x128xf32>
      %c0_36 = arith.constant 0 : index
      %c0_37 = arith.constant 0 : index
      %c0_38 = arith.constant 0 : index
      %47 = vector.load %arg6[%c0_36, %c0_37, %c0_38] : memref<1x8x128xf32, #tpu.memory_space<vmem>>, vector<1x8x128xf32>
      tpu.vector_store %arg6[%c0_36, %c0_37, %c0_38], %46 {strides = array<i32>} : memref<1x8x128xf32, #tpu.memory_space<vmem>>, vector<1x8x128xf32>,
    } else {
    }
    %c0 = arith.constant 0 : index
    %c0_1 = arith.constant 0 : index
    %3 = vector.load %arg2[%c0, %c0_1] : memref<16x128xf32, #tpu.memory_space<vmem>>, vector<16x128xf32>
    %c0_2 = arith.constant 0 : index
    %c0_3 = arith.constant 0 : index
    %4 = vector.load %arg3[%c0_2, %c0_3] : memref<16x128xf32, #tpu.memory_space<vmem>>, vector<16x128xf32>
    %5 = math.log %3 : vector<16x128xf32>
    %cst = arith.constant -1.000000e+02 : f32
    %6 = vector.broadcast %cst : f32 to vector<16x128xf32>
    %7 = arith.maximumf %5, %6 : vector<16x128xf32>
    %cst_4 = arith.constant 1.000000e+00 : f32
    %8 = vector.broadcast %cst_4 : f32 to vector<16x128xf32>
    %9 = arith.subf %8, %3 : vector<16x128xf32>
    %10 = math.log %9 : vector<16x128xf32>
    %cst_5 = arith.constant -1.000000e+02 : f32
    %11 = vector.broadcast %cst_5 : f32 to vector<16x128xf32>
    %12 = arith.maximumf %10, %11 : vector<16x128xf32>
    %13 = arith.subf %7, %12 : vector<16x128xf32>
    %14 = arith.mulf %4, %13 : vector<16x128xf32>
    %15 = arith.addf %12, %14 : vector<16x128xf32>
    %c0_6 = arith.constant 0 : index
    %c0_7 = arith.constant 0 : index
    %c0_8 = arith.constant 0 : index
    %16 = vector.load %arg4[%c0_6, %c0_7, %c0_8] : memref<1x8x128xf32, #tpu.memory_space<vmem>>, vector<1x8x128xf32>
    %17 = vector.shape_cast %16 : vector<1x8x128xf32> to vector<8x128xf32>
    %18 = arith.mulf %3, %4 : vector<16x128xf32>
    %19 = vector.shape_cast %18 : vector<16x128xf32> to vector<2x8x128xf32>
    %cst_9 = arith.constant dense<0.000000e+00> : vector<8x128xf32>
    %20 = vector.multi_reduction <add>, %19, %cst_9 [0] : vector<2x8x128xf32> to vector<8x128xf32>
    %21 = arith.addf %17, %20 : vector<8x128xf32>
    %c0_10 = arith.constant 0 : index
    %c0_11 = arith.constant 0 : index
    %c0_12 = arith.constant 0 : index
    %22 = vector.load %arg4[%c0_10, %c0_11, %c0_12] : memref<1x8x128xf32, #tpu.memory_space<vmem>>, vector<1x8x128xf32>
    %23 = vector.shape_cast %22 : vector<1x8x128xf32> to vector<8x128xf32>
    %24 = vector.shape_cast %21 : vector<8x128xf32> to vector<1x8x128xf32>
    tpu.vector_store %arg4[%c0_10, %c0_11, %c0_12], %24 {strides = array<i32>} : memref<1x8x128xf32, #tpu.memory_space<vmem>>, vector<1x8x128xf32>,
    %c0_13 = arith.constant 0 : index
    %c0_14 = arith.constant 0 : index
    %c0_15 = arith.constant 0 : index
    %25 = vector.load %arg5[%c0_13, %c0_14, %c0_15] : memref<1x8x128xf32, #tpu.memory_space<vmem>>, vector<1x8x128xf32>
    %26 = vector.shape_cast %25 : vector<1x8x128xf32> to vector<8x128xf32>
    %27 = arith.addf %3, %4 : vector<16x128xf32>
    %28 = vector.shape_cast %27 : vector<16x128xf32> to vector<2x8x128xf32>
    %cst_16 = arith.constant dense<0.000000e+00> : vector<8x128xf32>
    %29 = vector.multi_reduction <add>, %28, %cst_16 [0] : vector<2x8x128xf32> to vector<8x128xf32>
    %30 = arith.addf %26, %29 : vector<8x128xf32>
    %c0_17 = arith.constant 0 : index
    %c0_18 = arith.constant 0 : index
    %c0_19 = arith.constant 0 : index
    %31 = vector.load %arg5[%c0_17, %c0_18, %c0_19] : memref<1x8x128xf32, #tpu.memory_space<vmem>>, vector<1x8x128xf32>
    %32 = vector.shape_cast %31 : vector<1x8x128xf32> to vector<8x128xf32>
    %33 = vector.shape_cast %30 : vector<8x128xf32> to vector<1x8x128xf32>
    tpu.vector_store %arg5[%c0_17, %c0_18, %c0_19], %33 {strides = array<i32>} : memref<1x8x128xf32, #tpu.memory_space<vmem>>, vector<1x8x128xf32>,
    %c0_20 = arith.constant 0 : index
    %c0_21 = arith.constant 0 : index
    %c0_22 = arith.constant 0 : index
    %34 = vector.load %arg6[%c0_20, %c0_21, %c0_22] : memref<1x8x128xf32, #tpu.memory_space<vmem>>, vector<1x8x128xf32>
    %35 = vector.shape_cast %34 : vector<1x8x128xf32> to vector<8x128xf32>
    %36 = vector.shape_cast %15 : vector<16x128xf32> to vector<2x8x128xf32>
    %cst_23 = arith.constant dense<0.000000e+00> : vector<8x128xf32>
    %37 = vector.multi_reduction <add>, %36, %cst_23 [0] : vector<2x8x128xf32> to vector<8x128xf32>
    %38 = arith.addf %35, %37 : vector<8x128xf32>
    %c0_24 = arith.constant 0 : index
    %c0_25 = arith.constant 0 : index
    %c0_26 = arith.constant 0 : index
    %39 = vector.load %arg6[%c0_24, %c0_25, %c0_26] : memref<1x8x128xf32, #tpu.memory_space<vmem>>, vector<1x8x128xf32>
    %40 = vector.shape_cast %39 : vector<1x8x128xf32> to vector<8x128xf32>
    %41 = vector.shape_cast %38 : vector<8x128xf32> to vector<1x8x128xf32>
    tpu.vector_store %arg6[%c0_24, %c0_25, %c0_26], %41 {strides = array<i32>} : memref<1x8x128xf32, #tpu.memory_space<vmem>>, vector<1x8x128xf32>,
    return
  }
  func.func @transform_0(%arg0: i32, %arg1: i32) -> (i32, i32) {
    %c1_i32 = arith.constant 1 : i32
    %0 = arith.muli %arg0, %c1_i32 : i32
    %1 = arith.addi %0, %arg1 : i32
    %c0_i32 = arith.constant 0 : i32
    %2 = arith.minsi %1, %c0_i32 : i32
    %c0_i32_0 = arith.constant 0 : i32
    %c0_i32_1 = arith.constant 0 : i32
    return %2, %c0_i32_0 : i32, i32
  }
  func.func @transform_1(%arg0: i32, %arg1: i32) -> (i32, i32) {
    %c1_i32 = arith.constant 1 : i32
    %0 = arith.muli %arg0, %c1_i32 : i32
    %1 = arith.addi %0, %arg1 : i32
    %c0_i32 = arith.constant 0 : i32
    %2 = arith.minsi %1, %c0_i32 : i32
    %c0_i32_0 = arith.constant 0 : i32
    %c0_i32_1 = arith.constant 0 : i32
    return %2, %c0_i32_0 : i32, i32
  }
  func.func @transform_2(%arg0: i32, %arg1: i32) -> (i32, i32, i32) {
    %c0_i32 = arith.constant 0 : i32
    %c0_i32_0 = arith.constant 0 : i32
    %c0_i32_1 = arith.constant 0 : i32
    return %arg0, %c0_i32, %c0_i32_0 : i32, i32, i32
  }
  func.func @transform_3(%arg0: i32, %arg1: i32) -> (i32, i32, i32) {
    %c0_i32 = arith.constant 0 : i32
    %c0_i32_0 = arith.constant 0 : i32
    %c0_i32_1 = arith.constant 0 : i32
    return %arg0, %c0_i32, %c0_i32_0 : i32, i32, i32
  }
  func.func @transform_4(%arg0: i32, %arg1: i32) -> (i32, i32, i32) {
    %c0_i32 = arith.constant 0 : i32
    %c0_i32_0 = arith.constant 0 : i32
    %c0_i32_1 = arith.constant 0 : i32
    return %arg0, %c0_i32, %c0_i32_0 : i32, i32, i32
  }
}

</mosaic_0001>

<llo_original>
// kernel: tpu_custom_call.1
$region0: #{tpu_custom_call.1}
  #allocation0 [shape = 'u32[]', space=smem, size = 0x4, offset = 0x4, fixed_abs, tag = 'smem constant byte address 0x4 - core index']
  #allocation1 [shape = 'u32[144,128]{1,0:T(1,128)}', space=vmem, size = 0x12000, scoped, tag = 'internal scratch']
  %s0 = inlined_call_operand.hbm [shape: f32[16,128], index: 0, kind: input, shape index: {}]
  %s1 = inlined_call_operand.hbm [shape: f32[16,128], index: 1, kind: input, shape index: {}]
  %s2 = inlined_call_operand.hbm [shape: f32[1,8,128], index: 2, kind: output, shape index: {0}]
  %s3 = inlined_call_operand.hbm [shape: f32[1,8,128], index: 3, kind: output, shape index: {1}]
  %s4 = inlined_call_operand.hbm [shape: f32[1,8,128], index: 4, kind: output, shape index: {2}]
  %5 = xla_tuple %s2, %s3, %s4
  %s6 = sld [smem:[#allocation0]]
  $region46: #{tpu_custom_call.1} parent=0
    _
  %s8 = ssub.s32 1, %s6
  %s9 = scalar_select 0, %s8, %s6
  $region1: #{tpu_custom_call.1} parent=0
    #allocation2 [shape = 'u8[8192]{0}', space=vmem, size = 0x2000, scoped, tag = 'input window, operand 0, single buffered']
    #allocation3 [shape = 's32[1]{0}', space=sflag, size = 0x4, scoped, tag = 'scoped memory for tpu_custom_call.1']
    #allocation4 [shape = 's32[1]{0}', space=sflag, size = 0x4, scoped, tag = 'scoped memory for tpu_custom_call.1']
    #allocation5 [shape = 'u8[8192]{0}', space=vmem, size = 0x2000, scoped, tag = 'input window, operand 1, single buffered']
    #allocation6 [shape = 's32[1]{0}', space=sflag, size = 0x4, scoped, tag = 'scoped memory for tpu_custom_call.1']
    #allocation7 [shape = 'u8[4096]{0}', space=vmem, size = 0x1000, scoped, tag = 'output window, operand 0, single buffered']
    #allocation8 [shape = 'u8[4096]{0}', space=vmem, size = 0x1000, scoped, tag = 'output window, operand 1, single buffered']
    #allocation9 [shape = 's32[1]{0}', space=sflag, size = 0x4, scoped, tag = 'scoped memory for tpu_custom_call.1']
    #allocation10 [shape = 'u8[4096]{0}', space=vmem, size = 0x1000, scoped, tag = 'output window, operand 2, single buffered']
    %10 = vsyncpa [#allocation3], 0
    %11 = vsyncpa [#allocation6], 0
    %12 = vsyncpa [#allocation4], 0
    %13 = vsyncpa [#allocation9], 0
    // Predicated region
    $region2: #{tpu_custom_call.1} parent=1 // pred_check
      _
    $region3: #{tpu_custom_call.1} parent=1 // pred_check_branch
      %15 = sbr.rel (0) target = $region5
    $region4: #{tpu_custom_call.1} parent=1 // pred_region
      %s16 = sadd.s32 0, 0
      %p17 = scmp.lt.s32.totalorder %s16, 0
      %s18 = scalar_select %p17, %s16, 0
      %s19 = smul.u32 2, %s18
      %s21 = ssub.s32 256, 256
      %22 = vsyncadd [#allocation3], %s21
      %s23 = smul.addr %s19, 128
      %s24 = scalar_lea.hbm %s0, %s23
      %s25 = sshll.u32 [#allocation2], 4
      %s26 = int_to_ptr.vmem [resolvable:$true] %s25
      %31 = dma.hbm_to_vmem [thread:$0]  %s24, 256, %s26, [#allocation3], 128, 128, 8
    $region5: #{tpu_custom_call.1} parent=1 // pred_fallthru
      _
    // Predicated region
    $region6: #{tpu_custom_call.1} parent=1 // pred_check
      _
    $region7: #{tpu_custom_call.1} parent=1 // pred_check_branch
      %33 = sbr.rel (0) target = $region9
    $region8: #{tpu_custom_call.1} parent=1 // pred_region
      %s34 = sadd.s32 0, 0
      %p35 = scmp.lt.s32.totalorder %s34, 0
      %s36 = scalar_select %p35, %s34, 0
      %s37 = smul.u32 2, %s36
      %s39 = ssub.s32 256, 256
      %40 = vsyncadd [#allocation6], %s39
      %s41 = smul.addr %s37, 128
      %s42 = scalar_lea.hbm %s1, %s41
      %s43 = sshll.u32 [#allocation5], 4
      %s44 = int_to_ptr.vmem [resolvable:$true] %s43
      %49 = dma.hbm_to_vmem [thread:$0]  %s42, 256, %s44, [#allocation6], 128, 128, 8
    $region9: #{tpu_custom_call.1} parent=1 // pred_fallthru
      _
    // Predicated region
    $region10: #{tpu_custom_call.1} parent=1 // pred_check
      _
    $region11: #{tpu_custom_call.1} parent=1 // pred_check_branch
      %51 = sbr.rel (0) target = $region13
    $region12: #{tpu_custom_call.1} parent=1 // pred_region
      %52 = dma.done [#allocation3], 256
    $region13: #{tpu_custom_call.1} parent=1 // pred_fallthru
      _
    // Predicated region
    $region14: #{tpu_custom_call.1} parent=1 // pred_check
      _
    $region15: #{tpu_custom_call.1} parent=1 // pred_check_branch
      %54 = sbr.rel (0) target = $region17
    $region16: #{tpu_custom_call.1} parent=1 // pred_region
      %55 = dma.done [#allocation6], 256
    $region17: #{tpu_custom_call.1} parent=1 // pred_fallthru
      _
    %s56 = sadd.s32 0, 0
    %p57 = scmp.lt.s32.totalorder %s56, 0
    %s58 = scalar_select %p57, %s56, 0
    %s59 = smul.u32 2, %s58
    %s60 = sadd.s32 0, 0
    %p61 = scmp.lt.s32.totalorder %s60, 0
    %s62 = scalar_select %p61, %s60, 0
    %s63 = smul.u32 2, %s62
    %p64 = scmp.eq.s32.totalorder 0, 0
    // Predicated region
    $region18: #{tpu_custom_call.1} parent=1 // pred_check
      %p65 = pneg %p64
    $region19: #{tpu_custom_call.1} parent=1 // pred_check_branch
      %67 = sbr.rel (%p65) target = $region21
    $region20: #{tpu_custom_call.1} parent=1 // pred_region
      %68 = vst [vmem:[#allocation7] sm:$0xff] 0.0
      %69 = vst [vmem:[#allocation8] sm:$0xff] 0.0
      %70 = vst [vmem:[#allocation10] sm:$0xff] 0.0
    $region21: #{tpu_custom_call.1} parent=1 // pred_fallthru
      _
    %v71 = vld [vmem:[#allocation2] sm:$0xff]
    %v72 = vld [vmem:[#allocation2 + $0x8] sm:$0xff]
    %v73 = vld [vmem:[#allocation5] sm:$0xff]
    %v74 = vld [vmem:[#allocation5 + $0x8] sm:$0xff]
    %v75 = vlog2.pop %v71
    %v76 = vmul.f32 %v75, 0.6931472
    %v77 = vlog2.pop %v72
    %v78 = vmul.f32 %v77, 0.6931472
    %v79 = vmax.f32 %v76, -100.0
    %v80 = vmax.f32 %v78, -100.0
    %v81 = vsub.f32 1.0, %v71
    %v82 = vsub.f32 1.0, %v72
    %v83 = vlog2.pop %v81
    %v84 = vmul.f32 %v83, 0.6931472
    %v85 = vlog2.pop %v82
    %v86 = vmul.f32 %v85, 0.6931472
    %v87 = vmax.f32 %v84, -100.0
    %v88 = vmax.f32 %v86, -100.0
    %v89 = vsub.f32 %v79, %v87
    %v90 = vsub.f32 %v80, %v88
    %v91 = vmul.f32 %v73, %v89
    %v92 = vmul.f32 %v74, %v90
    %v93 = vadd.f32 %v87, %v91
    %v94 = vadd.f32 %v88, %v92
    %v95 = vld [vmem:[#allocation7] sm:$0xff]
    %v96 = vmul.f32 %v71, %v73
    %v97 = vmul.f32 %v72, %v74
    %v98 = vadd.f32 %v96, %v97
    %v99 = vadd.f32 %v95, %v98
    %100 = vst [vmem:[#allocation7] sm:$0xff] %v99
    %v101 = vld [vmem:[#allocation8] sm:$0xff]
    %v102 = vadd.f32 %v71, %v73
    %v103 = vadd.f32 %v72, %v74
    %v104 = vadd.f32 %v102, %v103
    %v105 = vadd.f32 %v101, %v104
    %106 = vst [vmem:[#allocation8] sm:$0xff] %v105
    %v107 = vld [vmem:[#allocation10] sm:$0xff]
    %v108 = vadd.f32 %v93, %v94
    %v109 = vadd.f32 %v107, %v108
    %110 = vst [vmem:[#allocation10] sm:$0xff] %v109
    // Predicated region
    $region22: #{tpu_custom_call.1} parent=1 // pred_check
      _
    $region23: #{tpu_custom_call.1} parent=1 // pred_check_branch
      %112 = sbr.rel (0) target = $region25
    $region24: #{tpu_custom_call.1} parent=1 // pred_region
      %s114 = ssub.s32 128, 128
      %115 = vsyncadd [#allocation4], %s114
      %s117 = sshll.u32 [#allocation7], 4
      %s118 = int_to_ptr.vmem [resolvable:$true] %s117
      %120 = dma.vmem_to_hbm [thread:$0]  %s118, 128, %s2, [#allocation4]
    $region25: #{tpu_custom_call.1} parent=1 // pred_fallthru
      _
    // Predicated region
    $region26: #{tpu_custom_call.1} parent=1 // pred_check
      _
    $region27: #{tpu_custom_call.1} parent=1 // pred_check_branch
      %122 = sbr.rel (0) target = $region29
    $region28: #{tpu_custom_call.1} parent=1 // pred_region
      %s124 = ssub.s32 128, 128
      %125 = vsyncadd [#allocation9], %s124
      %s127 = sshll.u32 [#allocation8], 4
      %s128 = int_to_ptr.vmem [resolvable:$true] %s127
      %130 = dma.vmem_to_hbm [thread:$0]  %s128, 128, %s3, [#allocation9]
    $region29: #{tpu_custom_call.1} parent=1 // pred_fallthru
      _
    // Predicated region
    $region30: #{tpu_custom_call.1} parent=1 // pred_check
      _
    $region31: #{tpu_custom_call.1} parent=1 // pred_check_branch
      %132 = sbr.rel (0) target = $region33
    $region32: #{tpu_custom_call.1} parent=1 // pred_region
      %s134 = ssub.s32 128, 128
      %135 = vsyncadd [#allocation9], %s134
      %s137 = sshll.u32 [#allocation10], 4
      %s138 = int_to_ptr.vmem [resolvable:$true] %s137
      %140 = dma.vmem_to_hbm [thread:$0]  %s138, 128, %s4, [#allocation9]
    $region33: #{tpu_custom_call.1} parent=1 // pred_fallthru
      _
    // Predicated region
    $region34: #{tpu_custom_call.1} parent=1 // pred_check
      _
    $region35: #{tpu_custom_call.1} parent=1 // pred_check_branch
      %142 = sbr.rel (0) target = $region37
    $region36: #{tpu_custom_call.1} parent=1 // pred_region
      %143 = dma.done [#allocation4], 128
    $region37: #{tpu_custom_call.1} parent=1 // pred_fallthru
      _
    // Predicated region
    $region38: #{tpu_custom_call.1} parent=1 // pred_check
      _
    $region39: #{tpu_custom_call.1} parent=1 // pred_check_branch
      %145 = sbr.rel (0) target = $region41
    $region40: #{tpu_custom_call.1} parent=1 // pred_region
      %146 = dma.done [#allocation9], 128
    $region41: #{tpu_custom_call.1} parent=1 // pred_fallthru
      _
    // Predicated region
    $region42: #{tpu_custom_call.1} parent=1 // pred_check
      _
    $region43: #{tpu_custom_call.1} parent=1 // pred_check_branch
      %148 = sbr.rel (0) target = $region45
    $region44: #{tpu_custom_call.1} parent=1 // pred_region
      %149 = dma.done [#allocation9], 128
    $region45: #{tpu_custom_call.1} parent=1 // pred_fallthru
      _
    %150 = vsyncpa [#allocation3], 1
    %151 = vsyncpa [#allocation6], 1
    %152 = vsyncpa [#allocation4], 1
    %153 = vsyncpa [#allocation9], 1

</llo_original>
